<compile_context>
chip_gen: v7x
topology: tpu7x:2x2x1
jax: 0.10.0
libtpu: 0.0.40
codegen_flags: <defaults>
</compile_context>

<pallas_src>
import functools

import numpy as np
import jax
import jax.numpy as jnp
from jax import lax
from jax.experimental import pallas as pl
from jax.experimental.pallas import tpu as pltpu


# ----------------------------------------------------------------------------
# Pallas kernel
# ----------------------------------------------------------------------------
def _cap_kernel(K_acc, fea_ref, negcT_ref, c2_ref, bias_ref, lab_ref, out_ref):
    # Raw (un-augmented, un-normalized) backbone features, any float dtype.
    # bf16 -> f32 upcast is exact, so the score matches an f32 reference on
    # the same (quantized) features bit-for-bit up to reordering.
    fea = fea_ref[...].astype(jnp.float32)                           # [TB, D]

    # ||[fea, 1]||  -- the ones-augmentation handled analytically (>= 1 > 0).
    n = jnp.sqrt(jnp.sum(fea * fea, axis=1, keepdims=True) + 1.0)    # [TB, 1]

    # Single MXU matmul vs the combined, pre-scaled (-2x) center bank
    # (without its ones column).
    cross = jnp.dot(fea, negcT_ref[...],
                    preferred_element_type=jnp.float32)               # [TB, K]

    # score_ij = n_i*||c_j||^2 - 2<[fea_i,1], c_j> = n_i*c2_j + cross_ij + bias_j
    # Argmin-equivalent to the reference cdist; fp rounding could only flip
    # exact ties (benign).
    score = n * c2_ref[...] + cross + bias_ref[...]                   # [TB, K]

    ids = lax.broadcasted_iota(jnp.int32, score.shape, 1)             # [TB, K]
    labels = lab_ref[...]                                             # [1, K] i32
    big = jnp.float32(jnp.inf)
    sentinel = jnp.int32(2 ** 30)

    # Accumulator bank lives in columns [0, K_acc).  Labelsets are sorted
    # ascending (np.where), so min-of-matching-labels reproduces argmin's
    # first-occurrence tie-break after the labelset remap.
    acc_s = jnp.where(ids < K_acc, score, big)
    acc_min = jnp.min(acc_s, axis=1, keepdims=True)
    acc_lab = jnp.min(jnp.where(acc_s == acc_min, labels, sentinel),
                      axis=1, keepdims=True)                          # [TB, 1]

    # Injection bank lives in columns [K_acc, K_total).
    inj_s = jnp.where(ids >= K_acc, score, big)
    inj_min = jnp.min(inj_s, axis=1, keepdims=True)
    inj_lab = jnp.min(jnp.where(inj_s == inj_min, labels, sentinel),
                      axis=1, keepdims=True)                          # [TB, 1]

    # Single merged [TB, 2] int32 output: lane 0 = accumulator label,
    # lane 1 = injection label (final labels; no downstream gather needed).
    lane = lax.broadcasted_iota(jnp.int32, out_ref.shape, 1)
    out_ref[...] = jnp.where(lane == 0, acc_lab, inj_lab)


def _round_up(x, m):
    return ((x + m - 1) // m) * m


def _pick_tb(B):
    # Large tiles amortize the ~0.35us per-grid-step overhead; for large B keep
    # the grid at >= 2 steps so v7x can shard the "parallel" batch axis across
    # its 2 TensorCores (no-op on v5e/v6e).  Even an 8192x32 f32 tile is ~1 MiB
    # double-buffered -- far inside every generation's VMEM, so no vmem limit
    # override is needed.
    if B <= 4096:
        return B
    return min(8192, _round_up(pl.cdiv(B, 2), 8))


def _cap_pallas_call(fea, neg2cT, c2_row, bias_row, label_row, K_acc, K_inj):
    B, D = fea.shape
    K_total = K_acc + K_inj
    TB = _pick_tb(B)
    grid = (pl.cdiv(B, TB),)
    kernel = functools.partial(_cap_kernel, K_acc)

    itemsize = jnp.dtype(fea.dtype).itemsize
    cost = pl.CostEstimate(
        flops=2 * B * D * K_total,
        transcendentals=B,                                   # per-row sqrt
        bytes_accessed=B * D * itemsize + B * 2 * 4 + (D + 3) * K_total * 4,
    )

    return pl.pallas_call(
        kernel,
        out_shape=jax.ShapeDtypeStruct((B, 2), jnp.int32),
        grid=grid,
        in_specs=[
            pl.BlockSpec((TB, D), lambda i: (i, 0)),         # features (pipelined)
            pl.BlockSpec((D, K_total), lambda i: (0, 0)),    # -2*centers[:, :D]^T (resident)
            pl.BlockSpec((1, K_total), lambda i: (0, 0)),    # ||c||^2 row        (resident)
            pl.BlockSpec((1, K_total), lambda i: (0, 0)),    # -2*centers[:, -1]  (resident)
            pl.BlockSpec((1, K_total), lambda i: (0, 0)),    # label row (int32)  (resident)
        ],
        out_specs=pl.BlockSpec((TB, 2), lambda i: (i, 0)),
        compiler_params=pltpu.CompilerParams(
            dimension_semantics=("parallel",)),
        cost_estimate=cost,
    )(fea, neg2cT, c2_row, bias_row, label_row)


# ----------------------------------------------------------------------------
# Module-level wrapper (mirrors CenterAwarePseudoModule)
# ----------------------------------------------------------------------------
class CenterAwarePseudo:
    """Holds the (synthetic) cluster centers / labelsets built in __init__."""

    def __init__(self, key, feat_dim=31, acc_K=12, inj_K=6, n_dataset=64,
                 threshold=0.0):
        # Synthetic stand-in for the dataset pass in the torch __init__:
        # reproduces the center-construction math on synthetic model outputs,
        # deterministically (host-side numpy, one-time cost).
        k1, k2, k3 = jax.random.split(key, 3)
        fea = np.asarray(jax.random.normal(k1, (n_dataset, feat_dim), jnp.float32))
        acc_logits = np.asarray(jax.random.normal(k2, (n_dataset, acc_K), jnp.float32))
        inj_logits = np.asarray(jax.random.normal(k3, (n_dataset, inj_K), jnp.float32))

        def softmax_np(z):
            z = z - z.max(axis=1, keepdims=True)
            e = np.exp(z)
            return e / e.sum(axis=1, keepdims=True)

        acc_aff = softmax_np(acc_logits)
        inj_aff = softmax_np(inj_logits)
        acc_pred = acc_aff.argmax(axis=1)
        inj_pred = inj_aff.argmax(axis=1)

        # cosine: append ones column and L2-normalize rows
        fea1 = np.concatenate([fea, np.ones((n_dataset, 1), np.float32)], axis=1)
        fea1 = fea1 / np.linalg.norm(fea1, axis=1, keepdims=True)

        acc_initc = acc_aff.T @ fea1
        acc_initc = acc_initc / (1e-08 + acc_aff.sum(axis=0)[:, None])
        inj_initc = inj_aff.T @ fea1
        inj_initc = inj_initc / (1e-08 + inj_aff.sum(axis=0)[:, None])

        acc_cls_count = np.eye(acc_K)[acc_pred].sum(axis=0)
        inj_cls_count = np.eye(inj_K)[inj_pred].sum(axis=0)
        acc_lab = np.where(acc_cls_count > threshold)[0]    # sorted ascending
        inj_lab = np.where(inj_cls_count > threshold)[0]    # sorted ascending
        # Empty banks would make every column +inf and emit the sentinel label.
        assert acc_lab.size > 0 and inj_lab.size > 0, \
            "threshold filtered out an entire center bank"

        self.accumulator_labelset = jnp.asarray(acc_lab.astype(np.int32))
        self.injection_labelset = jnp.asarray(inj_lab.astype(np.int32))
        self.accumulator_initc = jnp.asarray(acc_initc.astype(np.float32))
        self.injection_initc = jnp.asarray(inj_initc.astype(np.float32))
        self.feat_dim = feat_dim

        # --- fused kernel operands (static module parameters, built once) ---
        acc_sel = acc_initc[acc_lab].astype(np.float32)             # [K_acc, D+1]
        inj_sel = inj_initc[inj_lab].astype(np.float32)             # [K_inj, D+1]
        centers = np.concatenate([acc_sel, inj_sel], axis=0)        # [K_total, D+1]
        neg2 = -2.0 * centers
        self._neg2cT = jnp.asarray(
            np.ascontiguousarray(neg2[:, :feat_dim].T, dtype=np.float32))  # [D, K_total]
        self._bias_row = jnp.asarray(
            np.ascontiguousarray(neg2[:, feat_dim][None, :], dtype=np.float32))  # [1, K_total]
        self._c2_row = jnp.asarray(
            np.sum(centers * centers, axis=1, dtype=np.float32)[None, :])  # [1, K_total]
        self._label_row = jnp.asarray(
            np.concatenate([acc_lab, inj_lab]).astype(np.int32)[None, :])  # [1, K_total]
        self._K_acc = int(acc_lab.shape[0])
        self._K_inj = int(inj_lab.shape[0])

    def forward(self, model_fn, x):
        # TODO(synk): the backbone model is external to this module; a tiny
        # deterministic stand-in is used here (plain-JAX glue).
        fea = model_fn(x)                                   # [B, F] (bf16 or f32)
        fea = fea.reshape(fea.shape[0], -1)                 # flatten(1); no concat/cast
        labels = _cap_pallas_call(fea, self._neg2cT, self._c2_row,
                                  self._bias_row, self._label_row,
                                  self._K_acc, self._K_inj)  # [B, 2] final labels
        acc_pred = labels[:, 0]
        inj_pred = labels[:, 1]
        return inj_pred, acc_pred                           # (injection, accumulator)


# ----------------------------------------------------------------------------
# Pure-JAX reference (original module math) for correctness check
# ----------------------------------------------------------------------------
def _reference_forward(mod, model_fn, x):
    fea = model_fn(x).reshape(x.shape[0], -1).astype(jnp.float32)
    fea = jnp.concatenate([fea, jnp.ones((fea.shape[0], 1), jnp.float32)], axis=1)
    fea = fea / jnp.linalg.norm(fea, axis=1, keepdims=True)

    def pred(centers, labelset):
        dd = jnp.sqrt(jnp.maximum(
            jnp.sum(fea**2, 1, keepdims=True) + jnp.sum(centers**2, 1)[None, :]
            - 2.0 * fea @ centers.T, 0.0))
        return labelset[jnp.argmin(dd, axis=1)]

    acc = pred(mod.accumulator_initc[mod.accumulator_labelset], mod.accumulator_labelset)
    inj = pred(mod.injection_initc[mod.injection_labelset], mod.injection_labelset)
    return inj, acc


# ----------------------------------------------------------------------------
if __name__ == "__main__":
    key = jax.random.PRNGKey(0)
    k_mod, k_x, k_w = jax.random.split(key, 3)

    # input in PyTorch NCHW convention
    B, C, H, W = 2, 4, 16, 16
    x = jax.random.normal(k_x, (B, C, H, W), jnp.float32)

    feat_dim = 31   # so the cosine-augmented dim is 32
    # deterministic synthetic backbone: flatten NCHW -> linear -> tanh, bf16 out
    W_feat = jax.random.normal(k_w, (C * H * W, feat_dim), jnp.float32) * 0.02

    def model_fn(inp):
        out = jnp.tanh(inp.reshape(inp.shape[0], -1) @ W_feat)
        return out.astype(jnp.bfloat16)     # bf16 feature stream into the kernel

    mod = CenterAwarePseudo(k_mod, feat_dim=feat_dim, acc_K=12, inj_K=6,
                            n_dataset=64, threshold=0.0)

    inj_pred, acc_pred = mod.forward(model_fn, x)
    jax.block_until_ready((inj_pred, acc_pred))

    ref_inj, ref_acc = _reference_forward(mod, model_fn, x)
    assert np.array_equal(np.asarray(inj_pred), np.asarray(ref_inj)), "injection mismatch"
    assert np.array_equal(np.asarray(acc_pred), np.asarray(ref_acc)), "accumulator mismatch"

    print("KERNEL_OK")
</pallas_src>

<mosaic_0001>
module attributes {stable_mosaic.version = 11 : i64} {
  func.func @_cap_kernel(%arg0: i32, %arg1: memref<2x31xbf16, #tpu.memory_space<vmem>>, %arg2: memref<31x18xf32, #tpu.memory_space<vmem>>, %arg3: memref<1x18xf32, #tpu.memory_space<vmem>>, %arg4: memref<1x18xf32, #tpu.memory_space<vmem>>, %arg5: memref<1x18xi32, #tpu.memory_space<vmem>>, %arg6: memref<2x2xi32, #tpu.memory_space<vmem>>) attributes {dimension_semantics = [#tpu.dimension_semantics<parallel>], iteration_bounds = array<i64: 1>, scalar_prefetch = 0 : i64, scratch_operands = 0 : i64, tpu.core_type = #tpu.core_type<tc>, window_params = [{transform_indices = @transform_0, window_bounds = array<i64: 2, 31>}, {pipeline_mode = #tpu.pipeline_mode<synchronous>, transform_indices = @transform_1, window_bounds = array<i64: 31, 18>}, {pipeline_mode = #tpu.pipeline_mode<synchronous>, transform_indices = @transform_2, window_bounds = array<i64: 1, 18>}, {pipeline_mode = #tpu.pipeline_mode<synchronous>, transform_indices = @transform_3, window_bounds = array<i64: 1, 18>}, {pipeline_mode = #tpu.pipeline_mode<synchronous>, transform_indices = @transform_4, window_bounds = array<i64: 1, 18>}, {transform_indices = @transform_5, window_bounds = array<i64: 2, 2>}]} {
    %c0 = arith.constant 0 : index
    %c0_0 = arith.constant 0 : index
    %0 = vector.load %arg1[%c0, %c0_0] : memref<2x31xbf16, #tpu.memory_space<vmem>>, vector<2x31xbf16>
    %1 = arith.extf %0 : vector<2x31xbf16> to vector<2x31xf32>
    %2 = arith.mulf %1, %1 : vector<2x31xf32>
    %cst = arith.constant dense<0.000000e+00> : vector<2xf32>
    %3 = vector.multi_reduction <add>, %2, %cst [1] : vector<2x31xf32> to vector<2xf32>
    %4 = vector.shape_cast %3 : vector<2xf32> to vector<2x1xf32>
    %cst_1 = arith.constant 1.000000e+00 : f32
    %5 = vector.broadcast %cst_1 : f32 to vector<2x1xf32>
    %6 = arith.addf %4, %5 : vector<2x1xf32>
    %7 = math.sqrt %6 : vector<2x1xf32>
    %c0_2 = arith.constant 0 : index
    %c0_3 = arith.constant 0 : index
    %8 = vector.load %arg2[%c0_2, %c0_3] : memref<31x18xf32, #tpu.memory_space<vmem>>, vector<31x18xf32>
    %cst_4 = arith.constant dense<0.000000e+00> : vector<2x18xf32>
    %9 = tpu.matmul %1, %8, %cst_4 {dimension_numbers = #tpu.dot_dimension_numbers<[1], [0], [0], [1], [0, 0, 1, 1], [], []>} : vector<2x31xf32>, vector<31x18xf32>, vector<2x18xf32> -> vector<2x18xf32>
    %c0_5 = arith.constant 0 : index
    %c0_6 = arith.constant 0 : index
    %10 = vector.load %arg3[%c0_5, %c0_6] : memref<1x18xf32, #tpu.memory_space<vmem>>, vector<1x18xf32>
    %11 = vector.broadcast %7 : vector<2x1xf32> to vector<2x18xf32>
    %12 = vector.broadcast %10 : vector<1x18xf32> to vector<2x18xf32>
    %13 = arith.mulf %11, %12 : vector<2x18xf32>
    %14 = arith.addf %13, %9 : vector<2x18xf32>
    %c0_7 = arith.constant 0 : index
    %c0_8 = arith.constant 0 : index
    %15 = vector.load %arg4[%c0_7, %c0_8] : memref<1x18xf32, #tpu.memory_space<vmem>>, vector<1x18xf32>
    %16 = vector.broadcast %15 : vector<1x18xf32> to vector<2x18xf32>
    %17 = arith.addf %14, %16 : vector<2x18xf32>
    %18 = tpu.iota {dimensions = array<i32: 1>} : vector<2x18xi32>
    %c0_9 = arith.constant 0 : index
    %c0_10 = arith.constant 0 : index
    %19 = vector.load %arg5[%c0_9, %c0_10] : memref<1x18xi32, #tpu.memory_space<vmem>>, vector<1x18xi32>
    %c12_i32 = arith.constant 12 : i32
    %20 = vector.broadcast %c12_i32 : i32 to vector<2x18xi32>
    %21 = arith.cmpi slt, %18, %20 : vector<2x18xi32>
    %cst_11 = arith.constant 0x7F800000 : f32
    %22 = vector.broadcast %cst_11 : f32 to vector<2x18xf32>
    %23 = arith.select %21, %17, %22 : vector<2x18xi1>, vector<2x18xf32>
    %cst_12 = arith.constant dense<0x7F800000> : vector<2xf32>
    %24 = vector.multi_reduction <minimumf>, %23, %cst_12 [1] : vector<2x18xf32> to vector<2xf32>
    %25 = vector.shape_cast %24 : vector<2xf32> to vector<2x1xf32>
    %26 = vector.broadcast %25 : vector<2x1xf32> to vector<2x18xf32>
    %27 = arith.cmpf oeq, %23, %26 : vector<2x18xf32>
    %c1073741824_i32 = arith.constant 1073741824 : i32
    %28 = vector.shape_cast %19 : vector<1x18xi32> to vector<1x18xi32>
    %29 = vector.broadcast %28 : vector<1x18xi32> to vector<2x18xi32>
    %30 = vector.broadcast %c1073741824_i32 : i32 to vector<2x18xi32>
    %31 = arith.select %27, %29, %30 : vector<2x18xi1>, vector<2x18xi32>
    %cst_13 = arith.constant dense<2147483647> : vector<2xi32>
    %32 = vector.multi_reduction <minsi>, %31, %cst_13 [1] : vector<2x18xi32> to vector<2xi32>
    %33 = vector.shape_cast %32 : vector<2xi32> to vector<2x1xi32>
    %c12_i32_14 = arith.constant 12 : i32
    %34 = vector.broadcast %c12_i32_14 : i32 to vector<2x18xi32>
    %35 = arith.cmpi sge, %18, %34 : vector<2x18xi32>
    %cst_15 = arith.constant 0x7F800000 : f32
    %36 = vector.broadcast %cst_15 : f32 to vector<2x18xf32>
    %37 = arith.select %35, %17, %36 : vector<2x18xi1>, vector<2x18xf32>
    %cst_16 = arith.constant dense<0x7F800000> : vector<2xf32>
    %38 = vector.multi_reduction <minimumf>, %37, %cst_16 [1] : vector<2x18xf32> to vector<2xf32>
    %39 = vector.shape_cast %38 : vector<2xf32> to vector<2x1xf32>
    %40 = vector.broadcast %39 : vector<2x1xf32> to vector<2x18xf32>
    %41 = arith.cmpf oeq, %37, %40 : vector<2x18xf32>
    %c1073741824_i32_17 = arith.constant 1073741824 : i32
    %42 = vector.shape_cast %19 : vector<1x18xi32> to vector<1x18xi32>
    %43 = vector.broadcast %42 : vector<1x18xi32> to vector<2x18xi32>
    %44 = vector.broadcast %c1073741824_i32_17 : i32 to vector<2x18xi32>
    %45 = arith.select %41, %43, %44 : vector<2x18xi1>, vector<2x18xi32>
    %cst_18 = arith.constant dense<2147483647> : vector<2xi32>
    %46 = vector.multi_reduction <minsi>, %45, %cst_18 [1] : vector<2x18xi32> to vector<2xi32>
    %47 = vector.shape_cast %46 : vector<2xi32> to vector<2x1xi32>
    %48 = tpu.iota {dimensions = array<i32: 1>} : vector<2x2xi32>
    %c0_i32 = arith.constant 0 : i32
    %49 = vector.broadcast %c0_i32 : i32 to vector<2x2xi32>
    %50 = arith.cmpi eq, %48, %49 : vector<2x2xi32>
    %51 = vector.shape_cast %33 : vector<2x1xi32> to vector<2x1xi32>
    %52 = vector.broadcast %51 : vector<2x1xi32> to vector<2x2xi32>
    %53 = vector.shape_cast %47 : vector<2x1xi32> to vector<2x1xi32>
    %54 = vector.broadcast %53 : vector<2x1xi32> to vector<2x2xi32>
    %55 = arith.select %50, %52, %54 : vector<2x2xi1>, vector<2x2xi32>
    %c0_19 = arith.constant 0 : index
    %c0_20 = arith.constant 0 : index
    %56 = vector.load %arg6[%c0_19, %c0_20] : memref<2x2xi32, #tpu.memory_space<vmem>>, vector<2x2xi32>
    tpu.vector_store %arg6[%c0_19, %c0_20], %55 {strides = array<i32>} : memref<2x2xi32, #tpu.memory_space<vmem>>, vector<2x2xi32>,
    return
  }
  func.func @transform_0(%arg0: i32) -> (i32, i32) {
    %c0_i32 = arith.constant 0 : i32
    %c0_i32_0 = arith.constant 0 : i32
    return %arg0, %c0_i32 : i32, i32
  }
  func.func @transform_1(%arg0: i32) -> (i32, i32) {
    %c0_i32 = arith.constant 0 : i32
    %c0_i32_0 = arith.constant 0 : i32
    %c0_i32_1 = arith.constant 0 : i32
    return %c0_i32, %c0_i32_0 : i32, i32
  }
  func.func @transform_2(%arg0: i32) -> (i32, i32) {
    %c0_i32 = arith.constant 0 : i32
    %c0_i32_0 = arith.constant 0 : i32
    %c0_i32_1 = arith.constant 0 : i32
    return %c0_i32, %c0_i32_0 : i32, i32
  }
  func.func @transform_3(%arg0: i32) -> (i32, i32) {
    %c0_i32 = arith.constant 0 : i32
    %c0_i32_0 = arith.constant 0 : i32
    %c0_i32_1 = arith.constant 0 : i32
    return %c0_i32, %c0_i32_0 : i32, i32
  }
  func.func @transform_4(%arg0: i32) -> (i32, i32) {
    %c0_i32 = arith.constant 0 : i32
    %c0_i32_0 = arith.constant 0 : i32
    %c0_i32_1 = arith.constant 0 : i32
    return %c0_i32, %c0_i32_0 : i32, i32
  }
  func.func @transform_5(%arg0: i32) -> (i32, i32) {
    %c0_i32 = arith.constant 0 : i32
    %c0_i32_0 = arith.constant 0 : i32
    return %arg0, %c0_i32 : i32, i32
  }
}

</mosaic_0001>

<llo_original>
// kernel: tpu_custom_call.1
$region0: #{tpu_custom_call.1}
  #allocation0 [shape = 'u32[]', space=smem, size = 0x4, offset = 0x4, fixed_abs, tag = 'smem constant byte address 0x4 - core index']
  #allocation1 [shape = 'u32[144,128]{1,0:T(1,128)}', space=vmem, size = 0x12000, scoped, tag = 'internal scratch']
  %s0 = inlined_call_operand.vmem [shape: bf16[2,31], index: 0, kind: input, shape index: {}]
  %s1 = inlined_call_operand.vmem [shape: f32[31,18], index: 1, kind: input, shape index: {}]
  %s2 = inlined_call_operand.vmem [shape: f32[1,18], index: 2, kind: input, shape index: {}]
  %s3 = inlined_call_operand.vmem [shape: f32[1,18], index: 3, kind: input, shape index: {}]
  %s4 = inlined_call_operand.vmem [shape: s32[1,18], index: 4, kind: input, shape index: {}]
  %s5 = inlined_call_operand.hbm [shape: s32[2,2], index: 5, kind: output, shape index: {}]
  %s6 = sld [smem:[#allocation0]]
  $region30: #{tpu_custom_call.1} parent=0
    _
  %s8 = ssub.s32 1, %s6
  %s9 = scalar_select 0, %s8, %s6
  $region1: #{tpu_custom_call.1} parent=0
    #allocation2 [shape = 'u8[1024]{0}', space=vmem, size = 0x400, scoped, tag = 'output window, operand 0, single buffered']
    #allocation3 [shape = 's32[1]{0}', space=sflag, size = 0x4, scoped, tag = 'scoped memory for tpu_custom_call.1']
    %10 = vsyncpa [#allocation3], 0
    // Predicated region
    $region2: #{tpu_custom_call.1} parent=1 // pred_check
      _
    $region3: #{tpu_custom_call.1} parent=1 // pred_check_branch
      %12 = sbr.rel (0) target = $region5
    $region4: #{tpu_custom_call.1} parent=1 // pred_region
      _
    $region5: #{tpu_custom_call.1} parent=1 // pred_fallthru
      _
    // Predicated region
    $region6: #{tpu_custom_call.1} parent=1 // pred_check
      _
    $region7: #{tpu_custom_call.1} parent=1 // pred_check_branch
      %14 = sbr.rel (0) target = $region9
    $region8: #{tpu_custom_call.1} parent=1 // pred_region
      _
    $region9: #{tpu_custom_call.1} parent=1 // pred_fallthru
      _
    // Predicated region
    $region10: #{tpu_custom_call.1} parent=1 // pred_check
      _
    $region11: #{tpu_custom_call.1} parent=1 // pred_check_branch
      %16 = sbr.rel (0) target = $region13
    $region12: #{tpu_custom_call.1} parent=1 // pred_region
      _
    $region13: #{tpu_custom_call.1} parent=1 // pred_fallthru
      _
    // Predicated region
    $region14: #{tpu_custom_call.1} parent=1 // pred_check
      _
    $region15: #{tpu_custom_call.1} parent=1 // pred_check_branch
      %18 = sbr.rel (0) target = $region17
    $region16: #{tpu_custom_call.1} parent=1 // pred_region
      _
    $region17: #{tpu_custom_call.1} parent=1 // pred_fallthru
      _
    // Predicated region
    $region18: #{tpu_custom_call.1} parent=1 // pred_check
      _
    $region19: #{tpu_custom_call.1} parent=1 // pred_check_branch
      %20 = sbr.rel (0) target = $region21
    $region20: #{tpu_custom_call.1} parent=1 // pred_region
      _
    $region21: #{tpu_custom_call.1} parent=1 // pred_fallthru
      _
    %v21 = vld [vmem:[%s0] sm:$0x1]
    %v22 = vunpack.c.l.bf16 %v21
    %v23 = vmul.f32 %v22, %v22
    %vm24 = vcmask 246784
    %v25 = vsel %vm24, %v23, 0.0
    %26 = vadd.xlane.f32.xlu0 %v25
    %v27 = vpop.xlane.xlu0 %26
    %v28 = vadd.f32 %v27, 1.0
    %v29 = vrsqrt.pop %v28
    %v30 = vmul.f32 %v28, %v29
    %vm31 = vcmp.eq.f32.partialorder %v28, inf
    %v32 = vsel %vm31, %v28, %v30
    %vm33 = vcmp.eq.f32.partialorder %v28, 0.0
    %v34 = vand.u32 %v28, 2147483648
    %v35 = vsel %vm33, %v34, %v32
    %v36 = vld [vmem:[%s1] sm:$0xff]
    %v37 = vld [vmem:[%s1 + $0x8] sm:$0xff]
    %v38 = vld [vmem:[%s1 + $0x10] sm:$0xff]
    %v39 = vld [vmem:[%s1 + $0x18] sm:$0x7f]
    %vm40 = vcmask 252928
    %v42 = vsel %vm40, %v22, 0
    %vm44 = vcmask 1046528
    %v46 = vsel %vm44, %v39, 0
    %48 = vmatprep.subr.mxu0 0.0
    %49 = vmatpush1.msra.mxu0 %v36
    %50 = vmatprep.subr.mxu0 0.0
    %51 = vmatpush1.msra.mxu0 %v37
    %52 = vmatprep.subr.mxu0 0.0
    %53 = vmatpush1.msra.mxu0 %v38
    %54 = vmatprep.subr.mxu0 0.0
    %55 = vmatpush1.msra.mxu0 %v46
    %56 = vmatprep.subr.mxu0 0.0
    %57 = vmatpush1.msra.mxu0 0.0
    %58 = vmatprep.subr.mxu0 0.0
    %59 = vmatpush1.msra.mxu0 0.0
    %60 = vmatprep.subr.mxu0 0.0
    %61 = vmatpush1.msra.mxu0 0.0
    %62 = vmatprep.subr.mxu0 0.0
    %63 = vmatpush1.msra.mxu0 0.0
    %64 = vmatprep.subr.mxu0 0.0
    %65 = vmatpush1.msra.mxu0 0.0
    %66 = vmatprep.subr.mxu0 0.0
    %67 = vmatpush1.msra.mxu0 0.0
    %68 = vmatprep.subr.mxu0 0.0
    %69 = vmatpush1.msra.mxu0 0.0
    %70 = vmatprep.subr.mxu0 0.0
    %71 = vmatpush1.msra.mxu0 0.0
    %72 = vmatprep.subr.mxu0 0.0
    %73 = vmatpush1.msra.mxu0 0.0
    %74 = vmatprep.subr.mxu0 0.0
    %75 = vmatpush1.msra.mxu0 0.0
    %76 = vmatprep.subr.mxu0 0.0
    %77 = vmatpush1.msra.mxu0 0.0
    %78 = vmatprep.subr.mxu0 0.0
    %79 = vmatpush1.msra.mxu0 0.0
    %80 = vmatprep.subr.mxu0 0.0
    %81 = vmatpush1.msra.mxu0 0.0
    %82 = vmatprep.subr.mxu0 0.0
    %83 = vmatpush1.msra.mxu0 0.0
    %84 = vmatprep.subr.mxu0 0.0
    %85 = vmatpush1.msra.mxu0 0.0
    %86 = vmatprep.subr.mxu0 0.0
    %87 = vmatpush1.msra.mxu0 0.0
    %88 = vmatprep.subr.mxu0 0.0
    %89 = vmatpush1.msra.mxu0 0.0
    %90 = vmatprep.subr.mxu0 0.0
    %91 = vmatpush1.msra.mxu0 0.0
    %92 = vmatprep.subr.mxu0 0.0
    %93 = vmatpush1.msra.mxu0 0.0
    %94 = vmatprep.subr.mxu0 0.0
    %95 = vmatpush1.msra.mxu0 0.0
    %96 = vmatprep.subr.mxu0 0.0
    %97 = vmatpush1.msra.mxu0 0.0
    %98 = vmatprep.subr.mxu0 0.0
    %99 = vmatpush1.msra.mxu0 0.0
    %100 = vmatprep.subr.mxu0 0.0
    %101 = vmatpush1.msra.mxu0 0.0
    %102 = vmatprep.subr.mxu0 0.0
    %103 = vmatpush1.msra.mxu0 0.0
    %104 = vmatprep.subr.mxu0 0.0
    %105 = vmatpush1.msra.mxu0 0.0
    %106 = vmatprep.subr.mxu0 0.0
    %107 = vmatpush1.msra.mxu0 0.0
    %108 = vmatprep.subr.mxu0 0.0
    %109 = vmatpush1.msra.mxu0 0.0
    %110 = vmatprep.subr.mxu0 0.0
    %111 = vmatpush1.msra.mxu0 0.0
    %112 = vmatprep.mubr.f32.mxu0 0.0
    %113 = vmatmul.mubr.f32.gmra.mrb[0].mxu0 %v42
    %v114 = vpop.f32.mrb[0].mxu0
    %v115 = vadd.f32 0.0, %v114
    %v116 = vpop.f32.mrb[0].mxu0
    %117 = vdwg.mxu0
    %v118 = vld [vmem:[%s2] sm:$0x1]
    %v120 = vlaneseq
    %v121 = vshrl.u32 %v120, 7
    %v122 = vsub.s32 0, %v121
    %v123 = vrot.slane %v118, %v122
    %v125 = vmul.f32 %v35, %v123
    %v126 = vadd.f32 %v125, %v115
    %v127 = vld [vmem:[%s3] sm:$0x1]
    %v129 = vlaneseq
    %v130 = vshrl.u32 %v129, 7
    %v131 = vsub.s32 0, %v130
    %v132 = vrot.slane %v127, %v131
    %v134 = vadd.f32 %v126, %v132
    %v135 = vlaneseq
    %v136 = vand.u32 %v135, 127
    %v137 = vld [vmem:[%s4] sm:$0x1]
    %vm138 = vcmp.lt.s32.totalorder %v136, 12
    %v139 = vsel %vm138, %v134, inf
    %vm140 = vcmask 140288
    %v141 = vsel %vm140, %v139, inf
    %142 = vmin.xlane.f32.xlu0 %v141
    %v143 = vpop.xlane.xlu0 %142
    %vm144 = vcmp.eq.f32.partialorder %v139, %v143
    %v145 = vlaneseq
    %v146 = vshrl.u32 %v145, 7
    %v147 = vsub.s32 0, %v146
    %v148 = vrot.slane %v137, %v147
    %v149 = vsel %vm144, %v148, 1073741824
    %v150 = vsel %vm140, %v149, 2147483647
    %v151 = vand.u32 %v150, 65535
    %v152 = vshra.s32 %v150, 16
    %v153 = vcvt.s32.f32 %v151
    %v154 = vcvt.s32.f32 %v152
    %155 = vmin.xlane.f32.xlu0 %v154
    %v156 = vpop.xlane.xlu0 %155
    %vm157 = vcmp.eq.f32.partialorder %v154, %v156
    %v158 = vsel %vm157, %v153, inf
    %159 = vmin.xlane.f32.xlu0 %v158
    %v160 = vpop.xlane.xlu0 %159
    %v161 = vcvt.f32.s32 %v160
    %v162 = vcvt.f32.s32 %v156
    %v163 = vshll.u32 %v162, 16
    %v164 = vadd.s32 %v163, %v161
    %vm165 = vcmp.ge.s32.totalorder %v136, 12
    %v166 = vsel %vm165, %v134, inf
    %v167 = vsel %vm140, %v166, inf
    %168 = vmin.xlane.f32.xlu0 %v167
    %v169 = vpop.xlane.xlu0 %168
    %vm170 = vcmp.eq.f32.partialorder %v166, %v169
    %v171 = vsel %vm170, %v148, 1073741824
    %v172 = vsel %vm140, %v171, 2147483647
    %v173 = vand.u32 %v172, 65535
    %v174 = vshra.s32 %v172, 16
    %v175 = vcvt.s32.f32 %v173
    %v176 = vcvt.s32.f32 %v174
    %177 = vmin.xlane.f32.xlu0 %v176
    %v178 = vpop.xlane.xlu0 %177
    %vm179 = vcmp.eq.f32.partialorder %v176, %v178
    %v180 = vsel %vm179, %v175, inf
    %181 = vmin.xlane.f32.xlu0 %v180
    %v182 = vpop.xlane.xlu0 %181
    %v183 = vcvt.f32.s32 %v182
    %v184 = vcvt.f32.s32 %v178
    %v185 = vshll.u32 %v184, 16
    %v186 = vadd.s32 %v185, %v183
    %vm187 = vcmp.eq.s32.totalorder %v136, 0
    %v188 = vsel %vm187, %v164, %v186
    %vm189 = vcmask 9216
    %190 = vst.msk [vmem:[#allocation2] sm:$0x3] %vm189, %v188
    // Predicated region
    $region22: #{tpu_custom_call.1} parent=1 // pred_check
      _
    $region23: #{tpu_custom_call.1} parent=1 // pred_check_branch
      %192 = sbr.rel (0) target = $region25
    $region24: #{tpu_custom_call.1} parent=1 // pred_region
      %s194 = ssub.s32 32, 32
      %195 = vsyncadd [#allocation3], %s194
      %s197 = sshll.u32 [#allocation2], 4
      %s198 = int_to_ptr.vmem [resolvable:$true] %s197
      %200 = dma.vmem_to_hbm [thread:$0]  %s198, 32, %s5, [#allocation3]
    $region25: #{tpu_custom_call.1} parent=1 // pred_fallthru
      _
    // Predicated region
    $region26: #{tpu_custom_call.1} parent=1 // pred_check
      _
    $region27: #{tpu_custom_call.1} parent=1 // pred_check_branch
      %202 = sbr.rel (0) target = $region29
    $region28: #{tpu_custom_call.1} parent=1 // pred_region
      %203 = dma.done [#allocation3], 32
    $region29: #{tpu_custom_call.1} parent=1 // pred_fallthru
      _
    %204 = vsyncpa [#allocation3], 1

</llo_original>
